<compile_context>
chip_gen: v6e
topology: v6e:2x2x1
jax: 0.10.0
libtpu: 0.0.40
codegen_flags: <defaults>
</compile_context>

<pallas_src>
import functools

import jax
import jax.numpy as jnp
from jax.experimental import pallas as pl
from jax.experimental.pallas import tpu as pltpu


# ----------------------------------------------------------------------------
# Plain-JAX parameter setup: the (data-independent) circuit unitary.
# ----------------------------------------------------------------------------
_I2 = jnp.eye(2, dtype=jnp.complex64)
_X2 = jnp.array([[0.0, 1.0], [1.0, 0.0]], dtype=jnp.complex64)
_P0 = jnp.array([[1.0, 0.0], [0.0, 0.0]], dtype=jnp.complex64)
_P1 = jnp.array([[0.0, 0.0], [0.0, 1.0]], dtype=jnp.complex64)


def _kron_chain(mats):
    out = mats[0]
    for m in mats[1:]:
        out = jnp.kron(out, m)
    return out


def _rz(a):
    a = jnp.asarray(a, jnp.float32)
    em = jnp.exp(-0.5j * a).astype(jnp.complex64)
    ep = jnp.exp(0.5j * a).astype(jnp.complex64)
    z = jnp.zeros((), jnp.complex64)
    return jnp.stack([jnp.stack([em, z]), jnp.stack([z, ep])])


def _ry(a):
    a = jnp.asarray(a, jnp.float32)
    c = jnp.cos(0.5 * a).astype(jnp.complex64)
    s = jnp.sin(0.5 * a).astype(jnp.complex64)
    return jnp.stack([jnp.stack([c, -s]), jnp.stack([s, c])])


def _rot(phi, theta, omega):
    # PennyLane qml.Rot(phi, theta, omega) = RZ(omega) @ RY(theta) @ RZ(phi)
    return _rz(omega) @ _ry(theta) @ _rz(phi)


def _embed_1q(gate, wire, nq):
    ops = [_I2] * nq
    ops[wire] = gate
    return _kron_chain(ops)


def _cnot_full(ctrl, tgt, nq):
    ops0 = [_I2] * nq
    ops0[ctrl] = _P0
    ops1 = [_I2] * nq
    ops1[ctrl] = _P1
    ops1[tgt] = _X2
    return _kron_chain(ops0) + _kron_chain(ops1)


def build_circuit_unitary(q_params, nq):
    """Unitary of all StronglyEntanglingLayers (the data-independent part)."""
    dim = 2 ** nq
    U = jnp.eye(dim, dtype=jnp.complex64)
    for w in q_params:                       # each w: (1, nq, 3)
        wl = w[0]
        layer = jnp.eye(dim, dtype=jnp.complex64)
        for j in range(nq):                  # Rot on every wire
            layer = _embed_1q(_rot(wl[j, 0], wl[j, 1], wl[j, 2]), j, nq) @ layer
        if nq > 1:                           # CNOT ring, range r = 1
            for j in range(nq):
                layer = _cnot_full(j, (j + 1) % nq, nq) @ layer
        U = layer @ U
    return U


# ----------------------------------------------------------------------------
# Pallas kernel: RY-encoded product state, one MXU matmul against
# [Re(U^T) | Im(U^T)], fused |amp|^2 @ (PauliZ . W^T) + bias (lane-dense, 128).
# ----------------------------------------------------------------------------
def hqc_kernel(x_ref, sel_ref, uc_ref, zw2_ref, b_ref, out_ref):
    x = x_ref[...]                                   # (TB, NQ) RY angles, f32
    NQ = x.shape[1]

    c = jnp.cos(0.5 * x)                             # (TB, NQ)
    s = jnp.sin(0.5 * x)
    sel = sel_ref[...] > 0.5                         # (NQ, D): True where bit_j(i)==1

    # Product state after RY encoding of |0...0> (real amplitudes, wire 0 = MSB).
    # Seeded from qubit 0, then one vselect + one multiply per remaining qubit.
    # TODO(synk): 8-samples-per-row block-diagonal packing (K=8*D, N=2*8*D) if a
    # large-batch profile ever shows this kernel VPU/MXU-bound rather than
    # step-overhead-bound.
    psi = jnp.where(sel[0:1, :], s[:, 0:1], c[:, 0:1])            # (TB, D)
    for j in range(1, NQ):                                        # static unroll
        psi = psi * jnp.where(sel[j:j + 1, :], s[:, j:j + 1], c[:, j:j + 1])

    # Single MXU matmul against [Re(U^T) | Im(U^T)] (bf16 operands for NQ<=8,
    # f32 accumulation either way).
    f = jnp.dot(psi.astype(uc_ref.dtype), uc_ref[...],
                preferred_element_type=jnp.float32)               # (TB, 2D)

    # probs @ (zmat @ W^T) + b  ==  (f*f) @ [[zw],[zw]] + b.
    # zw2 / b are zero-padded to 128 lanes on the host, so this store is
    # lane-dense (unmasked vst) and the matmul has a native N=128.
    out_ref[...] = (
        jnp.dot(f * f, zw2_ref[...], preferred_element_type=jnp.float32)
        + b_ref[...]
    )


def _round_up(n, m):
    return ((n + m - 1) // m) * m


@functools.partial(jax.jit, static_argnames=("batch_tile",))
def hybrid_quantum_classifier(x, q_params, fc_w, fc_b, *, batch_tile=2048):
    B, NQ = x.shape
    D = 2 ** NQ
    C = fc_w.shape[0]
    Cp = _round_up(max(C, 1), 128)                   # lane-dense padded class dim

    # ---- host-side (parameter-only) setup, all jitted/cached ----------------
    U = build_circuit_unitary(q_params, NQ)                       # (D, D) complex64
    # bf16 strictly as MXU input format; amplitude-level bf16 error ~ sqrt(D),
    # so keep f32 for larger circuits.
    u_dtype = jnp.bfloat16 if NQ <= 8 else jnp.float32
    # psi is real -> psi @ U^T done as one real matmul against [Re | Im].
    uc = jnp.concatenate([jnp.real(U).T, jnp.imag(U).T], axis=1).astype(u_dtype)  # (D, 2D)

    idx = jnp.arange(D)[:, None]
    jq = jnp.arange(NQ)[None, :]
    bits = (idx >> (NQ - 1 - jq)) & 1                             # (D, NQ) bit_j(i)
    sel = bits.T.astype(jnp.float32)                              # (NQ, D) resident mask
    zmat = (1.0 - 2.0 * bits).astype(jnp.float32)                 # (D, NQ) PauliZ diag
    zw = zmat @ fc_w.T.astype(jnp.float32)                        # (D, C): fused <Z> + FC
    zw2 = jnp.concatenate([zw, zw], axis=0)                       # (2D, C): acts on f*f
    zw2 = jnp.pad(zw2, ((0, 0), (0, Cp - C)))                     # (2D, Cp) lane-dense
    b2 = jnp.pad(fc_b.astype(jnp.float32), (0, Cp - C)).reshape(1, Cp)

    # ---- batch tiling --------------------------------------------------------
    if B >= 16:
        # >= 2 grid steps so ("parallel",) can shard the batch across v7x's two
        # TensorCores; otherwise the biggest sublane-aligned tile (amortize the
        # ~0.35us/step grid overhead).
        TB = min(_round_up(batch_tile, 8), _round_up(pl.cdiv(B, 2), 8))
    else:
        TB = _round_up(B, 8)
    TB = max(TB, 8)
    Bp = _round_up(B, TB)
    xp = x.astype(jnp.float32)
    if Bp != B:
        xp = jnp.pad(xp, ((0, Bp - B), (0, 0)))     # padded rows: garbage, sliced off
    grid = (Bp // TB,)

    # ---- generation-aware VMEM limit (only when actually needed) ------------
    lane = lambda n: _round_up(max(n, 1), 128)
    sub = lambda n: _round_up(max(n, 1), 8)
    u_bytes = jnp.dtype(u_dtype).itemsize
    resident = (sub(NQ) * lane(D) * 4                 # sel mask
                + sub(D) * lane(2 * D) * u_bytes      # uc
                + sub(2 * D) * lane(Cp) * 4           # zw2
                + lane(Cp) * 4)                       # bias
    per_tile = TB * lane(NQ) * 4 + TB * lane(Cp) * 4  # x + out (double-buffered)
    interm = TB * lane(D) * 6 + TB * lane(2 * D) * 12  # psi (f32+bf16), f, f*f
    need = int(1.25 * (2 * per_tile + 2 * resident + interm))

    cp_kwargs = dict(dimension_semantics=("parallel",))   # v7x: 2 TCs split batch
    if need > 16 * 1024 * 1024:                            # smallest default (v5e)
        try:
            vmem_cap = pltpu.get_tpu_info().vmem_capacity_bytes
        except Exception:
            vmem_cap = 64 * 1024 * 1024                    # conservative: v7x physical
        # Never request below any generation's default scoped limit (32 MiB on
        # v6e/v7x) and keep ~25% physical headroom (<=48 MiB v7x, <=96 MiB v5e/v6e).
        cp_kwargs["vmem_limit_bytes"] = min(max(need, 32 * 1024 * 1024),
                                            (vmem_cap * 3) // 4)
    # TODO(synk): column-tile uc over lanes with a second grid axis when
    # 2*D*D*u_bytes approaches the per-generation VMEM budget (large n_qubits).

    # Constant index_map -> single buffer for the resident operands.
    resident_mode = dict(pipeline_mode=pl.Buffered(1))
    in_specs = [
        pl.BlockSpec((TB, NQ), lambda i: (i, 0)),                       # x: batch tiles
        pl.BlockSpec((NQ, D), lambda i: (0, 0), **resident_mode),       # bit-selector mask
        pl.BlockSpec((D, 2 * D), lambda i: (0, 0), **resident_mode),    # [Re|Im](U^T)
        pl.BlockSpec((2 * D, Cp), lambda i: (0, 0), **resident_mode),   # fused <Z>@W^T (padded)
        pl.BlockSpec((1, Cp), lambda i: (0, 0), **resident_mode),       # bias (padded)
    ]

    out = pl.pallas_call(
        hqc_kernel,
        out_shape=jax.ShapeDtypeStruct((Bp, Cp), jnp.float32),
        grid=grid,
        in_specs=in_specs,
        out_specs=pl.BlockSpec((TB, Cp), lambda i: (i, 0)),              # lane-dense
        compiler_params=pltpu.CompilerParams(**cp_kwargs),
    )(xp, sel, uc, zw2, b2)
    return out[:B, :C]


# ----------------------------------------------------------------------------
# Pure-JAX reference (f32/complex64, same math, no Pallas) for a sanity check.
# ----------------------------------------------------------------------------
def reference_forward(x, q_params, fc_w, fc_b):
    B, NQ = x.shape
    D = 2 ** NQ
    U = build_circuit_unitary(q_params, NQ)
    c = jnp.cos(0.5 * x)
    s = jnp.sin(0.5 * x)
    psi = jnp.ones((B, D), dtype=jnp.float32)
    for j in range(NQ):
        bit = (jnp.arange(D)[None, :] >> (NQ - 1 - j)) & 1
        psi = psi * jnp.where(bit == 0, c[:, j:j + 1], s[:, j:j + 1])
    fin = psi.astype(jnp.complex64) @ U.T
    probs = jnp.abs(fin) ** 2
    idx = jnp.arange(D)[:, None]
    jq = jnp.arange(NQ)[None, :]
    zmat = (1.0 - 2.0 * ((idx >> (NQ - 1 - jq)) & 1)).astype(jnp.float32)
    zexp = probs @ zmat
    return zexp @ fc_w.T + fc_b[None, :]


# TODO(synk): encoding='amplitude' (AmplitudeEmbedding) branch is not
# implemented; the module's default encoding='rotation' path is what is built.

if __name__ == "__main__":
    n_qubits, n_layers, n_classes = 4, 2, 3

    key = jax.random.PRNGKey(0)
    k_x, k_fc_w, k_fc_b, *k_layers = jax.random.split(key, 3 + n_layers)

    q_params = [
        0.01 * jax.random.normal(k, (1, n_qubits, 3), jnp.float32) for k in k_layers
    ]
    fc_w = 0.1 * jax.random.normal(k_fc_w, (n_classes, n_qubits), jnp.float32)
    fc_b = 0.1 * jax.random.normal(k_fc_b, (n_classes,), jnp.float32)

    # batch=8 exercises the single-step path; batch=20 exercises the >=2-step
    # (v7x-megacore) path with batch padding.
    for batch in (8, 20):
        kx = jax.random.fold_in(k_x, batch)
        x = jax.random.uniform(kx, (batch, n_qubits), jnp.float32, 0.0, jnp.pi)

        logits = hybrid_quantum_classifier(x, q_params, fc_w, fc_b)
        logits = jax.block_until_ready(logits)

        ref = reference_forward(x, q_params, fc_w, fc_b)
        assert logits.shape == (batch, n_classes)
        # bf16 U operand (f32 accumulation) -> slightly looser than pure f32.
        assert jnp.allclose(logits, ref, atol=2e-2, rtol=2e-2), (logits, ref)

    print("KERNEL_OK")
</pallas_src>

<mosaic_0001>
module attributes {stable_mosaic.version = 11 : i64} {
  func.func @hqc_kernel(%arg0: i32, %arg1: memref<8x4xf32, #tpu.memory_space<vmem>>, %arg2: memref<4x16xf32, #tpu.memory_space<vmem>>, %arg3: memref<16x32xbf16, #tpu.memory_space<vmem>>, %arg4: memref<32x128xf32, #tpu.memory_space<vmem>>, %arg5: memref<1x128xf32, #tpu.memory_space<vmem>>, %arg6: memref<8x128xf32, #tpu.memory_space<vmem>>) attributes {dimension_semantics = [#tpu.dimension_semantics<parallel>], iteration_bounds = array<i64: 1>, scalar_prefetch = 0 : i64, scratch_operands = 0 : i64, tpu.core_type = #tpu.core_type<tc>, window_params = [{transform_indices = @transform_0, window_bounds = array<i64: 8, 4>}, {pipeline_mode = #tpu.pipeline_mode<synchronous>, transform_indices = @transform_1, window_bounds = array<i64: 4, 16>}, {pipeline_mode = #tpu.pipeline_mode<synchronous>, transform_indices = @transform_2, window_bounds = array<i64: 16, 32>}, {pipeline_mode = #tpu.pipeline_mode<synchronous>, transform_indices = @transform_3, window_bounds = array<i64: 32, 128>}, {pipeline_mode = #tpu.pipeline_mode<synchronous>, transform_indices = @transform_4, window_bounds = array<i64: 1, 128>}, {transform_indices = @transform_5, window_bounds = array<i64: 8, 128>}]} {
    %c0 = arith.constant 0 : index
    %c0_0 = arith.constant 0 : index
    %0 = vector.load %arg1[%c0, %c0_0] : memref<8x4xf32, #tpu.memory_space<vmem>>, vector<8x4xf32>
    %cst = arith.constant 5.000000e-01 : f32
    %1 = vector.broadcast %cst : f32 to vector<8x4xf32>
    %2 = arith.mulf %1, %0 : vector<8x4xf32>
    %3 = math.cos %2 : vector<8x4xf32>
    %cst_1 = arith.constant 5.000000e-01 : f32
    %4 = vector.broadcast %cst_1 : f32 to vector<8x4xf32>
    %5 = arith.mulf %4, %0 : vector<8x4xf32>
    %6 = math.sin %5 : vector<8x4xf32>
    %c0_2 = arith.constant 0 : index
    %c0_3 = arith.constant 0 : index
    %7 = vector.load %arg2[%c0_2, %c0_3] : memref<4x16xf32, #tpu.memory_space<vmem>>, vector<4x16xf32>
    %cst_4 = arith.constant 5.000000e-01 : f32
    %8 = vector.broadcast %cst_4 : f32 to vector<4x16xf32>
    %9 = arith.cmpf ogt, %7, %8 : vector<4x16xf32>
    %10 = vector.extract_strided_slice %9 {offsets = [0, 0], sizes = [1, 16], strides = [1, 1]} : vector<4x16xi1> to vector<1x16xi1>
    %11 = vector.extract_strided_slice %6 {offsets = [0, 0], sizes = [8, 1], strides = [1, 1]} : vector<8x4xf32> to vector<8x1xf32>
    %12 = vector.extract_strided_slice %3 {offsets = [0, 0], sizes = [8, 1], strides = [1, 1]} : vector<8x4xf32> to vector<8x1xf32>
    %13 = vector.shape_cast %10 : vector<1x16xi1> to vector<1x16xi1>
    %14 = vector.broadcast %13 : vector<1x16xi1> to vector<8x16xi1>
    %15 = vector.shape_cast %11 : vector<8x1xf32> to vector<8x1xf32>
    %16 = vector.broadcast %15 : vector<8x1xf32> to vector<8x16xf32>
    %17 = vector.shape_cast %12 : vector<8x1xf32> to vector<8x1xf32>
    %18 = vector.broadcast %17 : vector<8x1xf32> to vector<8x16xf32>
    %19 = arith.select %14, %16, %18 : vector<8x16xi1>, vector<8x16xf32>
    %20 = vector.extract_strided_slice %9 {offsets = [1, 0], sizes = [1, 16], strides = [1, 1]} : vector<4x16xi1> to vector<1x16xi1>
    %21 = vector.extract_strided_slice %6 {offsets = [0, 1], sizes = [8, 1], strides = [1, 1]} : vector<8x4xf32> to vector<8x1xf32>
    %22 = vector.extract_strided_slice %3 {offsets = [0, 1], sizes = [8, 1], strides = [1, 1]} : vector<8x4xf32> to vector<8x1xf32>
    %23 = vector.shape_cast %20 : vector<1x16xi1> to vector<1x16xi1>
    %24 = vector.broadcast %23 : vector<1x16xi1> to vector<8x16xi1>
    %25 = vector.shape_cast %21 : vector<8x1xf32> to vector<8x1xf32>
    %26 = vector.broadcast %25 : vector<8x1xf32> to vector<8x16xf32>
    %27 = vector.shape_cast %22 : vector<8x1xf32> to vector<8x1xf32>
    %28 = vector.broadcast %27 : vector<8x1xf32> to vector<8x16xf32>
    %29 = arith.select %24, %26, %28 : vector<8x16xi1>, vector<8x16xf32>
    %30 = arith.mulf %19, %29 : vector<8x16xf32>
    %31 = vector.extract_strided_slice %9 {offsets = [2, 0], sizes = [1, 16], strides = [1, 1]} : vector<4x16xi1> to vector<1x16xi1>
    %32 = vector.extract_strided_slice %6 {offsets = [0, 2], sizes = [8, 1], strides = [1, 1]} : vector<8x4xf32> to vector<8x1xf32>
    %33 = vector.extract_strided_slice %3 {offsets = [0, 2], sizes = [8, 1], strides = [1, 1]} : vector<8x4xf32> to vector<8x1xf32>
    %34 = vector.shape_cast %31 : vector<1x16xi1> to vector<1x16xi1>
    %35 = vector.broadcast %34 : vector<1x16xi1> to vector<8x16xi1>
    %36 = vector.shape_cast %32 : vector<8x1xf32> to vector<8x1xf32>
    %37 = vector.broadcast %36 : vector<8x1xf32> to vector<8x16xf32>
    %38 = vector.shape_cast %33 : vector<8x1xf32> to vector<8x1xf32>
    %39 = vector.broadcast %38 : vector<8x1xf32> to vector<8x16xf32>
    %40 = arith.select %35, %37, %39 : vector<8x16xi1>, vector<8x16xf32>
    %41 = arith.mulf %30, %40 : vector<8x16xf32>
    %42 = vector.extract_strided_slice %9 {offsets = [3, 0], sizes = [1, 16], strides = [1, 1]} : vector<4x16xi1> to vector<1x16xi1>
    %43 = vector.extract_strided_slice %6 {offsets = [0, 3], sizes = [8, 1], strides = [1, 1]} : vector<8x4xf32> to vector<8x1xf32>
    %44 = vector.extract_strided_slice %3 {offsets = [0, 3], sizes = [8, 1], strides = [1, 1]} : vector<8x4xf32> to vector<8x1xf32>
    %45 = vector.shape_cast %42 : vector<1x16xi1> to vector<1x16xi1>
    %46 = vector.broadcast %45 : vector<1x16xi1> to vector<8x16xi1>
    %47 = vector.shape_cast %43 : vector<8x1xf32> to vector<8x1xf32>
    %48 = vector.broadcast %47 : vector<8x1xf32> to vector<8x16xf32>
    %49 = vector.shape_cast %44 : vector<8x1xf32> to vector<8x1xf32>
    %50 = vector.broadcast %49 : vector<8x1xf32> to vector<8x16xf32>
    %51 = arith.select %46, %48, %50 : vector<8x16xi1>, vector<8x16xf32>
    %52 = arith.mulf %41, %51 : vector<8x16xf32>
    %53 = arith.truncf %52 : vector<8x16xf32> to vector<8x16xbf16>
    %c0_5 = arith.constant 0 : index
    %c0_6 = arith.constant 0 : index
    %54 = vector.load %arg3[%c0_5, %c0_6] : memref<16x32xbf16, #tpu.memory_space<vmem>>, vector<16x32xbf16>
    %cst_7 = arith.constant dense<0.000000e+00> : vector<8x32xf32>
    %55 = tpu.matmul %53, %54, %cst_7 {dimension_numbers = #tpu.dot_dimension_numbers<[1], [0], [0], [1], [0, 0, 1, 1], [], []>} : vector<8x16xbf16>, vector<16x32xbf16>, vector<8x32xf32> -> vector<8x32xf32>
    %56 = arith.mulf %55, %55 : vector<8x32xf32>
    %c0_8 = arith.constant 0 : index
    %c0_9 = arith.constant 0 : index
    %57 = vector.load %arg4[%c0_8, %c0_9] : memref<32x128xf32, #tpu.memory_space<vmem>>, vector<32x128xf32>
    %cst_10 = arith.constant dense<0.000000e+00> : vector<8x128xf32>
    %58 = tpu.matmul %56, %57, %cst_10 {dimension_numbers = #tpu.dot_dimension_numbers<[1], [0], [0], [1], [0, 0, 1, 1], [], []>} : vector<8x32xf32>, vector<32x128xf32>, vector<8x128xf32> -> vector<8x128xf32>
    %c0_11 = arith.constant 0 : index
    %c0_12 = arith.constant 0 : index
    %59 = vector.load %arg5[%c0_11, %c0_12] : memref<1x128xf32, #tpu.memory_space<vmem>>, vector<1x128xf32>
    %60 = vector.broadcast %59 : vector<1x128xf32> to vector<8x128xf32>
    %61 = arith.addf %58, %60 : vector<8x128xf32>
    %c0_13 = arith.constant 0 : index
    %c0_14 = arith.constant 0 : index
    %62 = vector.load %arg6[%c0_13, %c0_14] : memref<8x128xf32, #tpu.memory_space<vmem>>, vector<8x128xf32>
    tpu.vector_store %arg6[%c0_13, %c0_14], %61 {strides = array<i32>} : memref<8x128xf32, #tpu.memory_space<vmem>>, vector<8x128xf32>,
    return
  }
  func.func @transform_0(%arg0: i32) -> (i32, i32) {
    %c0_i32 = arith.constant 0 : i32
    %c0_i32_0 = arith.constant 0 : i32
    return %arg0, %c0_i32 : i32, i32
  }
  func.func @transform_1(%arg0: i32) -> (i32, i32) {
    %c0_i32 = arith.constant 0 : i32
    %c0_i32_0 = arith.constant 0 : i32
    %c0_i32_1 = arith.constant 0 : i32
    return %c0_i32, %c0_i32_0 : i32, i32
  }
  func.func @transform_2(%arg0: i32) -> (i32, i32) {
    %c0_i32 = arith.constant 0 : i32
    %c0_i32_0 = arith.constant 0 : i32
    %c0_i32_1 = arith.constant 0 : i32
    return %c0_i32, %c0_i32_0 : i32, i32
  }
  func.func @transform_3(%arg0: i32) -> (i32, i32) {
    %c0_i32 = arith.constant 0 : i32
    %c0_i32_0 = arith.constant 0 : i32
    %c0_i32_1 = arith.constant 0 : i32
    return %c0_i32, %c0_i32_0 : i32, i32
  }
  func.func @transform_4(%arg0: i32) -> (i32, i32) {
    %c0_i32 = arith.constant 0 : i32
    %c0_i32_0 = arith.constant 0 : i32
    %c0_i32_1 = arith.constant 0 : i32
    return %c0_i32, %c0_i32_0 : i32, i32
  }
  func.func @transform_5(%arg0: i32) -> (i32, i32) {
    %c0_i32 = arith.constant 0 : i32
    %c0_i32_0 = arith.constant 0 : i32
    return %arg0, %c0_i32 : i32, i32
  }
}

</mosaic_0001>

<llo_original>
// kernel: hybrid_quantum_classifier.1
$region0: #{hybrid_quantum_classifier.1}
  #allocation0 [shape = 'u32[]', space=smem, size = 0x4, offset = 0x4, fixed_abs, tag = 'smem constant byte address 0x4 - core index']
  #allocation1 [shape = 'u32[144,128]{1,0:T(1,128)}', space=vmem, size = 0x12000, scoped, tag = 'internal scratch']
  %s0 = inlined_call_operand.vmem [shape: f32[8,4], index: 0, kind: input, shape index: {}]
  %s1 = inlined_call_operand.vmem [shape: f32[4,16], index: 1, kind: input, shape index: {}]
  %s2 = inlined_call_operand.vmem [shape: bf16[16,32], index: 2, kind: input, shape index: {}]
  %s3 = inlined_call_operand.vmem [shape: f32[32,128], index: 3, kind: input, shape index: {}]
  %s4 = inlined_call_operand.vmem [shape: f32[1,128], index: 4, kind: input, shape index: {}]
  %s5 = inlined_call_operand.vmem [shape: f32[8,128], index: 5, kind: output, shape index: {}]
  %s6 = sld [smem:[#allocation0]]
  $region30: #{hybrid_quantum_classifier.1} parent=0
    _
  %s8 = ssub.s32 1, %s6
  %s9 = scalar_select 0, %s8, %s6
  // Predicated region
  $region2: #{hybrid_quantum_classifier.1} parent=0 // pred_check
    _
  $region3: #{hybrid_quantum_classifier.1} parent=0 // pred_check_branch
    %11 = sbr.rel (0) target = $region5
  $region4: #{hybrid_quantum_classifier.1} parent=0 // pred_region
    _
  $region5: #{hybrid_quantum_classifier.1} parent=0 // pred_fallthru
    _
  // Predicated region
  $region6: #{hybrid_quantum_classifier.1} parent=0 // pred_check
    _
  $region7: #{hybrid_quantum_classifier.1} parent=0 // pred_check_branch
    %13 = sbr.rel (0) target = $region9
  $region8: #{hybrid_quantum_classifier.1} parent=0 // pred_region
    _
  $region9: #{hybrid_quantum_classifier.1} parent=0 // pred_fallthru
    _
  // Predicated region
  $region10: #{hybrid_quantum_classifier.1} parent=0 // pred_check
    _
  $region11: #{hybrid_quantum_classifier.1} parent=0 // pred_check_branch
    %15 = sbr.rel (0) target = $region13
  $region12: #{hybrid_quantum_classifier.1} parent=0 // pred_region
    _
  $region13: #{hybrid_quantum_classifier.1} parent=0 // pred_fallthru
    _
  // Predicated region
  $region14: #{hybrid_quantum_classifier.1} parent=0 // pred_check
    _
  $region15: #{hybrid_quantum_classifier.1} parent=0 // pred_check_branch
    %17 = sbr.rel (0) target = $region17
  $region16: #{hybrid_quantum_classifier.1} parent=0 // pred_region
    _
  $region17: #{hybrid_quantum_classifier.1} parent=0 // pred_fallthru
    _
  // Predicated region
  $region18: #{hybrid_quantum_classifier.1} parent=0 // pred_check
    _
  $region19: #{hybrid_quantum_classifier.1} parent=0 // pred_check_branch
    %19 = sbr.rel (0) target = $region21
  $region20: #{hybrid_quantum_classifier.1} parent=0 // pred_region
    _
  $region21: #{hybrid_quantum_classifier.1} parent=0 // pred_fallthru
    _
  %v21 = vld [vmem:[%s0] sm:$0xff]
  %v22 = vmul.f32 %v21, 0.5
  %v23 = vand.u32 2147483647, %v22
  %vm24 = vcmp.le.f32.partialorder %v23, 0.7853982
  %vm25 = vcmp.lt.s32.totalorder %v22, 0
  %v26 = vand.u32 %v22, 2139095040
  %v27 = vshrl.u32 %v26, 23
  %v28 = vsub.s32 %v27, 127
  %v29 = vand.u32 2147483647, %v22
  %v30 = vand.u32 %v29, 8388607
  %v31 = vor.u32 %v30, 8388608
  %v32 = vsub.s32 0, %v31
  %v33 = vadd.s32 %v28, 1
  %vm34 = vcmp.gt.s32.totalorder %v33, 0
  %v35 = vsel %vm34, %v33, 0
  %v36 = vshrl.u32 %v35, 5
  %v37 = vand.u32 %v35, 31
  %v38 = vsub.s32 32, %v37
  %v39 = vshrl.u32 683565275, %v38
  %v40 = vshll.u32 683565275, %v37
  %v41 = vshrl.u32 2475754826, %v38
  %v42 = vor.u32 %v40, %v41
  %v43 = vshll.u32 2475754826, %v37
  %v44 = vshrl.u32 2131351028, %v38
  %v45 = vor.u32 %v43, %v44
  %v46 = vshll.u32 2131351028, %v37
  %v47 = vshrl.u32 2102212464, %v38
  %v48 = vor.u32 %v46, %v47
  %v49 = vshll.u32 2102212464, %v37
  %v50 = vshrl.u32 920167782, %v38
  %v51 = vor.u32 %v49, %v50
  %v52 = vshll.u32 920167782, %v37
  %v53 = vshrl.u32 1326507024, %v38
  %v54 = vor.u32 %v52, %v53
  %vm55 = vcmp.lt.s32.totalorder %v36, 1
  %vm56 = vcmp.lt.s32.totalorder %v36, 2
  %vm57 = vcmp.lt.s32.totalorder %v36, 3
  %vm58 = vcmp.lt.s32.totalorder %v36, 4
  %v59 = vsel %vm55, %v39, %v42
  %v60 = vsel %vm58, %v48, 2102212464
  %v61 = vsel %vm57, %v45, %v60
  %v62 = vsel %vm56, %v59, %v61
  %v63 = vsel %vm55, %v42, %v45
  %v64 = vsel %vm58, %v51, 920167782
  %v65 = vsel %vm57, %v48, %v64
  %v66 = vsel %vm56, %v63, %v65
  %v67 = vsel %vm55, %v45, %v48
  %v68 = vsel %vm58, %v54, 1326507024
  %v69 = vsel %vm57, %v51, %v68
  %v70 = vsel %vm56, %v67, %v69
  %v71 = vshll.u32 %v31, 8
  %v72 = vmul.u32.u64.compose %v71, %v70
  %v73 = vextract.low.u32 %v72
  %v74 = vextract.high.u32 %v72
  %v75 = vmul.u32.u64.compose %v71, %v66
  %v76 = vextract.low.u32 %v75
  %v77 = vextract.high.u32 %v75
  %v78 = vmul.u32 %v71, %v62
  %v79 = vadd.s32 %v74, %v76
  %vm80 = vc.u32 %v74, %v76
  %v81 = vadd.s32 %v77, 1
  %v82 = vsel %vm80, %v81, %v77
  %v83 = vadd.s32 %v78, %v82
  %v84 = vadd.s32 %v83, 536870912
  %v85 = vshrl.u32 %v84, 30
  %v86 = vshll.u32 %v85, 30
  %v87 = vsub.s32 %v83, %v86
  %vm88 = vcmp.lt.s32.totalorder %v87, 0
  %v89 = vsub.s32 0, %v87
  %v90 = vsel %vm88, %v89, %v87
  %v91 = vclz %v90
  %v92 = vsub.s32 %v91, 2
  %vm93 = vcmp.gt.s32.totalorder 0, %v92
  %v94 = vsel %vm93, 0, %v92
  %v95 = vsub.s32 32, %v94
  %v96 = vshll.u32 %v87, %v94
  %v97 = vshrl.u32 %v79, %v95
  %v98 = vor.u32 %v96, %v97
  %v99 = vsub.s32 4294967266, %v94
  %v100 = vadd.s32 %v99, 127
  %v101 = vshll.u32 %v100, 23
  %v102 = vor.u32 4788187, %v101
  %v103 = vand.u32 2147483647, %v102
  %v105 = vcvt.s32.f32 %v98
  %v106 = vmul.f32 %v105, %v103
  %v107 = vxor.u32 %v106, 2147483648
  %v108 = vsel %vm25, %v107, %v106
  %v109 = vsub.s32 4, %v85
  %v110 = vsel %vm25, %v109, %v85
  %v111 = vsel %vm24, %v22, %v108
  %v112 = vsel %vm24, 0, %v110
  %v113 = vcosq.f32.pop %v111
  %v114 = vsinq.f32.pop %v111
  %vm115 = vweird.f32 %v22
  %v116 = vand.u32 %v112, 3
  %vm117 = vcmp.lt.s32.totalorder %v116, 2
  %vm118 = vcmp.eq.s32.totalorder %v116, 0
  %v119 = vxor.u32 %v114, 2147483648
  %v120 = vsel %vm118, %v113, %v119
  %vm121 = vcmp.eq.s32.totalorder %v116, 2
  %v122 = vxor.u32 %v113, 2147483648
  %v123 = vsel %vm121, %v122, %v114
  %v124 = vsel %vm117, %v120, %v123
  %v125 = vsel %vm115, nan, %v124
  %v126 = vand.u32 2147483647, %v22
  %vm127 = vcmp.le.f32.partialorder %v126, 0.7853982
  %vm128 = vcmp.lt.s32.totalorder %v22, 0
  %v129 = vand.u32 %v22, 2139095040
  %v130 = vshrl.u32 %v129, 23
  %v131 = vsub.s32 %v130, 127
  %v132 = vand.u32 2147483647, %v22
  %v133 = vand.u32 %v132, 8388607
  %v134 = vor.u32 %v133, 8388608
  %v135 = vsub.s32 0, %v134
  %v136 = vadd.s32 %v131, 1
  %vm137 = vcmp.gt.s32.totalorder %v136, 0
  %v138 = vsel %vm137, %v136, 0
  %v139 = vshrl.u32 %v138, 5
  %v140 = vand.u32 %v138, 31
  %v141 = vsub.s32 32, %v140
  %v142 = vshrl.u32 683565275, %v141
  %v143 = vshll.u32 683565275, %v140
  %v144 = vshrl.u32 2475754826, %v141
  %v145 = vor.u32 %v143, %v144
  %v146 = vshll.u32 2475754826, %v140
  %v147 = vshrl.u32 2131351028, %v141
  %v148 = vor.u32 %v146, %v147
  %v149 = vshll.u32 2131351028, %v140
  %v150 = vshrl.u32 2102212464, %v141
  %v151 = vor.u32 %v149, %v150
  %v152 = vshll.u32 2102212464, %v140
  %v153 = vshrl.u32 920167782, %v141
  %v154 = vor.u32 %v152, %v153
  %v155 = vshll.u32 920167782, %v140
  %v156 = vshrl.u32 1326507024, %v141
  %v157 = vor.u32 %v155, %v156
  %vm158 = vcmp.lt.s32.totalorder %v139, 1
  %vm159 = vcmp.lt.s32.totalorder %v139, 2
  %vm160 = vcmp.lt.s32.totalorder %v139, 3
  %vm161 = vcmp.lt.s32.totalorder %v139, 4
  %v162 = vsel %vm158, %v142, %v145
  %v163 = vsel %vm161, %v151, 2102212464
  %v164 = vsel %vm160, %v148, %v163
  %v165 = vsel %vm159, %v162, %v164
  %v166 = vsel %vm158, %v145, %v148
  %v167 = vsel %vm161, %v154, 920167782
  %v168 = vsel %vm160, %v151, %v167
  %v169 = vsel %vm159, %v166, %v168
  %v170 = vsel %vm158, %v148, %v151
  %v171 = vsel %vm161, %v157, 1326507024
  %v172 = vsel %vm160, %v154, %v171
  %v173 = vsel %vm159, %v170, %v172
  %v174 = vshll.u32 %v134, 8
  %v175 = vmul.u32.u64.compose %v174, %v173
  %v176 = vextract.low.u32 %v175
  %v177 = vextract.high.u32 %v175
  %v178 = vmul.u32.u64.compose %v174, %v169
  %v179 = vextract.low.u32 %v178
  %v180 = vextract.high.u32 %v178
  %v181 = vmul.u32 %v174, %v165
  %v182 = vadd.s32 %v177, %v179
  %vm183 = vc.u32 %v177, %v179
  %v184 = vadd.s32 %v180, 1
  %v185 = vsel %vm183, %v184, %v180
  %v186 = vadd.s32 %v181, %v185
  %v187 = vadd.s32 %v186, 536870912
  %v188 = vshrl.u32 %v187, 30
  %v189 = vshll.u32 %v188, 30
  %v190 = vsub.s32 %v186, %v189
  %vm191 = vcmp.lt.s32.totalorder %v190, 0
  %v192 = vsub.s32 0, %v190
  %v193 = vsel %vm191, %v192, %v190
  %v194 = vclz %v193
  %v195 = vsub.s32 %v194, 2
  %vm196 = vcmp.gt.s32.totalorder 0, %v195
  %v197 = vsel %vm196, 0, %v195
  %v198 = vsub.s32 32, %v197
  %v199 = vshll.u32 %v190, %v197
  %v200 = vshrl.u32 %v182, %v198
  %v201 = vor.u32 %v199, %v200
  %v202 = vsub.s32 4294967266, %v197
  %v203 = vadd.s32 %v202, 127
  %v204 = vshll.u32 %v203, 23
  %v205 = vor.u32 4788187, %v204
  %v206 = vand.u32 2147483647, %v205
  %v208 = vcvt.s32.f32 %v201
  %v209 = vmul.f32 %v208, %v206
  %v210 = vxor.u32 %v209, 2147483648
  %v211 = vsel %vm128, %v210, %v209
  %v212 = vsub.s32 4, %v188
  %v213 = vsel %vm128, %v212, %v188
  %v214 = vsel %vm127, %v22, %v211
  %v215 = vsel %vm127, 0, %v213
  %v216 = vcosq.f32.pop %v214
  %v217 = vsinq.f32.pop %v214
  %vm218 = vweird.f32 %v22
  %v219 = vadd.s32 %v215, 3
  %v220 = vand.u32 %v219, 3
  %vm221 = vcmp.lt.s32.totalorder %v220, 2
  %vm222 = vcmp.eq.s32.totalorder %v220, 0
  %v223 = vxor.u32 %v217, 2147483648
  %v224 = vsel %vm222, %v216, %v223
  %vm225 = vcmp.eq.s32.totalorder %v220, 2
  %v226 = vxor.u32 %v216, 2147483648
  %v227 = vsel %vm225, %v226, %v217
  %v228 = vsel %vm221, %v224, %v227
  %v229 = vsel %vm218, nan, %v228
  %v230 = vld [vmem:[%s1] sm:$0xf]
  %vm231 = vcmp.gt.f32.partialorder %v230, 0.5
  %v232 = vsel %vm231, 1, 0
  %vm233 = vcmp.eq.s32.totalorder %v232, 1
  %235 = vset.pattern.permute.xlu0 0
  %236 = vperm.xlu0 %235, %v229
  %v237 = vpop.permute.xlu0 %236
  %239 = vset.pattern.permute.xlu0 0
  %240 = vperm.xlu0 %239, %v125
  %v241 = vpop.permute.xlu0 %240
  %v242 = vrot.slane %v237, 1
  %v243 = vrot.slane %v237, 2
  %v244 = vrot.slane %v237, 3
  %v245 = vrot.slane %v237, 4
  %v246 = vrot.slane %v237, 5
  %v247 = vrot.slane %v237, 6
  %v248 = vrot.slane %v237, 7
  %v257 = vrot.slane %v241, 1
  %v258 = vrot.slane %v241, 2
  %v259 = vrot.slane %v241, 3
  %v260 = vrot.slane %v241, 4
  %v261 = vrot.slane %v241, 5
  %v262 = vrot.slane %v241, 6
  %v263 = vrot.slane %v241, 7
  %v272 = vsel %vm233, %v237, %v241
  %v273 = vsel %vm233, %v242, %v257
  %v274 = vsel %vm233, %v243, %v258
  %v275 = vsel %vm233, %v244, %v259
  %v276 = vsel %vm233, %v245, %v260
  %v277 = vsel %vm233, %v246, %v261
  %v278 = vsel %vm233, %v247, %v262
  %v279 = vsel %vm233, %v248, %v263
  %280 = vset.pattern.permute.xlu0 1
  %281 = vperm.xlu0 %280, %v229
  %v282 = vpop.permute.xlu0 %281
  %283 = vset.pattern.permute.xlu0 1
  %284 = vperm.xlu0 %283, %v125
  %v285 = vpop.permute.xlu0 %284
  %v286 = vrot.slane %v282, 7
  %v287 = vrot.slane %v282, 1
  %v288 = vrot.slane %v282, 2
  %v289 = vrot.slane %v282, 3
  %v290 = vrot.slane %v282, 4
  %v291 = vrot.slane %v282, 5
  %v292 = vrot.slane %v282, 6
  %v301 = vrot.slane %v285, 7
  %v302 = vrot.slane %v285, 1
  %v303 = vrot.slane %v285, 2
  %v304 = vrot.slane %v285, 3
  %v305 = vrot.slane %v285, 4
  %v306 = vrot.slane %v285, 5
  %v307 = vrot.slane %v285, 6
  %v316 = vsel %vm233, %v286, %v301
  %v317 = vsel %vm233, %v282, %v285
  %v318 = vsel %vm233, %v287, %v302
  %v319 = vsel %vm233, %v288, %v303
  %v320 = vsel %vm233, %v289, %v304
  %v321 = vsel %vm233, %v290, %v305
  %v322 = vsel %vm233, %v291, %v306
  %v323 = vsel %vm233, %v292, %v307
  %v332 = vrot.slane %v316, 1
  %v333 = vrot.slane %v317, 1
  %v334 = vrot.slane %v318, 1
  %v335 = vrot.slane %v319, 1
  %v336 = vrot.slane %v320, 1
  %v337 = vrot.slane %v321, 1
  %v338 = vrot.slane %v322, 1
  %v339 = vrot.slane %v323, 1
  %v348 = vmul.f32 %v272, %v332
  %v349 = vmul.f32 %v273, %v333
  %v350 = vmul.f32 %v274, %v334
  %v351 = vmul.f32 %v275, %v335
  %v352 = vmul.f32 %v276, %v336
  %v353 = vmul.f32 %v277, %v337
  %v354 = vmul.f32 %v278, %v338
  %v355 = vmul.f32 %v279, %v339
  %356 = vset.pattern.permute.xlu0 2
  %357 = vperm.xlu0 %356, %v229
  %v358 = vpop.permute.xlu0 %357
  %359 = vset.pattern.permute.xlu0 2
  %360 = vperm.xlu0 %359, %v125
  %v361 = vpop.permute.xlu0 %360
  %v362 = vrot.slane %v358, 6
  %v363 = vrot.slane %v358, 7
  %v364 = vrot.slane %v358, 1
  %v365 = vrot.slane %v358, 2
  %v366 = vrot.slane %v358, 3
  %v367 = vrot.slane %v358, 4
  %v368 = vrot.slane %v358, 5
  %v377 = vrot.slane %v361, 6
  %v378 = vrot.slane %v361, 7
  %v379 = vrot.slane %v361, 1
  %v380 = vrot.slane %v361, 2
  %v381 = vrot.slane %v361, 3
  %v382 = vrot.slane %v361, 4
  %v383 = vrot.slane %v361, 5
  %v392 = vsel %vm233, %v362, %v377
  %v393 = vsel %vm233, %v363, %v378
  %v394 = vsel %vm233, %v358, %v361
  %v395 = vsel %vm233, %v364, %v379
  %v396 = vsel %vm233, %v365, %v380
  %v397 = vsel %vm233, %v366, %v381
  %v398 = vsel %vm233, %v367, %v382
  %v399 = vsel %vm233, %v368, %v383
  %v408 = vrot.slane %v392, 2
  %v409 = vrot.slane %v393, 2
  %v410 = vrot.slane %v394, 2
  %v411 = vrot.slane %v395, 2
  %v412 = vrot.slane %v396, 2
  %v413 = vrot.slane %v397, 2
  %v414 = vrot.slane %v398, 2
  %v415 = vrot.slane %v399, 2
  %v424 = vmul.f32 %v348, %v408
  %v425 = vmul.f32 %v349, %v409
  %v426 = vmul.f32 %v350, %v410
  %v427 = vmul.f32 %v351, %v411
  %v428 = vmul.f32 %v352, %v412
  %v429 = vmul.f32 %v353, %v413
  %v430 = vmul.f32 %v354, %v414
  %v431 = vmul.f32 %v355, %v415
  %432 = vset.pattern.permute.xlu0 3
  %433 = vperm.xlu0 %432, %v229
  %v434 = vpop.permute.xlu0 %433
  %435 = vset.pattern.permute.xlu0 3
  %436 = vperm.xlu0 %435, %v125
  %v437 = vpop.permute.xlu0 %436
  %v438 = vrot.slane %v434, 5
  %v439 = vrot.slane %v434, 6
  %v440 = vrot.slane %v434, 7
  %v441 = vrot.slane %v434, 1
  %v442 = vrot.slane %v434, 2
  %v443 = vrot.slane %v434, 3
  %v444 = vrot.slane %v434, 4
  %v453 = vrot.slane %v437, 5
  %v454 = vrot.slane %v437, 6
  %v455 = vrot.slane %v437, 7
  %v456 = vrot.slane %v437, 1
  %v457 = vrot.slane %v437, 2
  %v458 = vrot.slane %v437, 3
  %v459 = vrot.slane %v437, 4
  %v468 = vsel %vm233, %v438, %v453
  %v469 = vsel %vm233, %v439, %v454
  %v470 = vsel %vm233, %v440, %v455
  %v471 = vsel %vm233, %v434, %v437
  %v472 = vsel %vm233, %v441, %v456
  %v473 = vsel %vm233, %v442, %v457
  %v474 = vsel %vm233, %v443, %v458
  %v475 = vsel %vm233, %v444, %v459
  %v484 = vrot.slane %v468, 3
  %v485 = vrot.slane %v469, 3
  %v486 = vrot.slane %v470, 3
  %v487 = vrot.slane %v471, 3
  %v488 = vrot.slane %v472, 3
  %v489 = vrot.slane %v473, 3
  %v490 = vrot.slane %v474, 3
  %v491 = vrot.slane %v475, 3
  %v500 = vmul.f32 %v424, %v484
  %v501 = vmul.f32 %v425, %v485
  %v502 = vmul.f32 %v426, %v486
  %v503 = vmul.f32 %v427, %v487
  %v504 = vmul.f32 %v428, %v488
  %v505 = vmul.f32 %v429, %v489
  %v506 = vmul.f32 %v430, %v490
  %v507 = vmul.f32 %v431, %v491
  %v508 = vpack.c.bf16 %v500, %v500
  %v509 = vpack.c.bf16 %v501, %v501
  %v510 = vpack.c.bf16 %v502, %v502
  %v511 = vpack.c.bf16 %v503, %v503
  %v512 = vpack.c.bf16 %v504, %v504
  %v513 = vpack.c.bf16 %v505, %v505
  %v514 = vpack.c.bf16 %v506, %v506
  %v515 = vpack.c.bf16 %v507, %v507
  %v516 = vld [vmem:[%s2] sm:$0xf]
  %v517 = vld [vmem:[%s2 + $0x4] sm:$0xf]
  %v526 = vunpack.c.l.b16 %v508
  %v527 = vunpack.c.l.b16 %v509
  %v528 = vunpack.c.l.b16 %v510
  %v529 = vunpack.c.l.b16 %v511
  %v530 = vunpack.c.l.b16 %v512
  %v531 = vunpack.c.l.b16 %v513
  %v532 = vunpack.c.l.b16 %v514
  %v533 = vunpack.c.l.b16 %v515
  %v534 = vrot.slane %v527, 7
  %vm535 = vcmask 1041409
  %v536 = vsel %vm535, %v534, %v526
  %v537 = vrot.slane %v528, 6
  %vm538 = vcmask 1042434
  %v539 = vsel %vm538, %v537, %v536
  %v540 = vrot.slane %v529, 5
  %vm541 = vcmask 1043459
  %v542 = vsel %vm541, %v540, %v539
  %v543 = vrot.slane %v530, 4
  %vm544 = vcmask 1044484
  %v545 = vsel %vm544, %v543, %v542
  %v546 = vrot.slane %v531, 3
  %vm547 = vcmask 1045509
  %v548 = vsel %vm547, %v546, %v545
  %v549 = vrot.slane %v532, 2
  %vm550 = vcmask 1046534
  %v551 = vsel %vm550, %v549, %v548
  %v552 = vrot.slane %v533, 1
  %vm553 = vcmask 1047559
  %v554 = vsel %vm553, %v552, %v551
  %v555 = vpack.c.b16 %v554, %v554
  %v558 = vunpack.c.l.b16 %v516
  %v559 = vunpack.c.l.b16 %v517
  %v560 = vpack.c.b16 %v559, %v558
  %vm562 = vcmask 130048
  %v564 = vsel %vm562, %v555, 0
  %566 = vmatprep.subr.bf16.mxu0 0
  %567 = vmatpush1.bf16.msra.mxu0 0
  %568 = vmatprep.subr.bf16.mxu0 0
  %569 = vmatpush1.bf16.msra.mxu0 0
  %570 = vmatprep.subr.bf16.mxu0 0
  %571 = vmatpush1.bf16.msra.mxu0 0
  %572 = vmatprep.subr.bf16.mxu0 0
  %573 = vmatpush1.bf16.msra.mxu0 0
  %574 = vmatprep.subr.bf16.mxu0 0
  %575 = vmatpush1.bf16.msra.mxu0 0
  %576 = vmatprep.subr.bf16.mxu0 0
  %577 = vmatpush1.bf16.msra.mxu0 0
  %578 = vmatprep.subr.bf16.mxu0 0
  %579 = vmatpush1.bf16.msra.mxu0 0
  %580 = vmatprep.subr.bf16.mxu0 0
  %581 = vmatpush1.bf16.msra.mxu0 %v560
  %582 = vmatprep.subr.bf16.mxu0 0
  %583 = vmatpush2.bf16.msra.mxu0 0
  %584 = vmatprep.subr.bf16.mxu0 0
  %585 = vmatpush2.bf16.msra.mxu0 0
  %586 = vmatprep.subr.bf16.mxu0 0
  %587 = vmatpush2.bf16.msra.mxu0 0
  %588 = vmatprep.subr.bf16.mxu0 0
  %589 = vmatpush2.bf16.msra.mxu0 0
  %590 = vmatprep.subr.bf16.mxu0 0
  %591 = vmatpush2.bf16.msra.mxu0 0
  %592 = vmatprep.subr.bf16.mxu0 0
  %593 = vmatpush2.bf16.msra.mxu0 0
  %594 = vmatprep.subr.bf16.mxu0 0
  %595 = vmatpush2.bf16.msra.mxu0 0
  %596 = vmatprep.subr.bf16.mxu0 0
  %597 = vmatpush2.bf16.msra.mxu0 0
  %598 = vmatprep.mubr.bf16.mxu0 0
  %599 = vmatmul.mubr.bf16.gmra.mxu0 %v564
  %v600 = vpop.f32.mrf.mxu0
  %v601 = vadd.f32 0.0, %v600
  %v602 = vpop.f32.mrf.mxu0
  %v603 = vpop.f32.mrf.mxu0
  %v604 = vpop.f32.mrf.mxu0
  %605 = vdwg.mxu0
  %v606 = vmul.f32 %v601, %v601
  %v607 = vld [vmem:[%s3] sm:$0xff]
  %v608 = vld [vmem:[%s3 + $0x8] sm:$0xff]
  %v609 = vld [vmem:[%s3 + $0x10] sm:$0xff]
  %v610 = vld [vmem:[%s3 + $0x18] sm:$0xff]
  %v611 = vld [vmem:[%s4] sm:$0x1]
  %v613 = vlaneseq
  %v614 = vshrl.u32 %v613, 7
  %v615 = vsub.s32 0, %v614
  %v616 = vrot.slane %v611, %v615
  %vm618 = vcmask 261120
  %v620 = vsel %vm618, %v606, 0
  %622 = vmatprep.subr.mxu0 0.0
  %623 = vmatpush1.msra.mxu0 0.0
  %624 = vmatprep.subr.mxu0 0.0
  %625 = vmatpush1.msra.mxu0 0.0
  %626 = vmatprep.subr.mxu0 0.0
  %627 = vmatpush1.msra.mxu0 0.0
  %628 = vmatprep.subr.mxu0 0.0
  %629 = vmatpush1.msra.mxu0 0.0
  %630 = vmatprep.subr.mxu0 0.0
  %631 = vmatpush1.msra.mxu0 0.0
  %632 = vmatprep.subr.mxu0 0.0
  %633 = vmatpush1.msra.mxu0 0.0
  %634 = vmatprep.subr.mxu0 0.0
  %635 = vmatpush1.msra.mxu0 0.0
  %636 = vmatprep.subr.mxu0 0.0
  %637 = vmatpush1.msra.mxu0 0.0
  %638 = vmatprep.subr.mxu0 0.0
  %639 = vmatpush1.msra.mxu0 0.0
  %640 = vmatprep.subr.mxu0 0.0
  %641 = vmatpush1.msra.mxu0 0.0
  %642 = vmatprep.subr.mxu0 0.0
  %643 = vmatpush1.msra.mxu0 0.0
  %644 = vmatprep.subr.mxu0 0.0
  %645 = vmatpush1.msra.mxu0 0.0
  %646 = vmatprep.subr.mxu0 0.0
  %647 = vmatpush1.msra.mxu0 %v610
  %648 = vmatprep.subr.mxu0 0.0
  %649 = vmatpush1.msra.mxu0 %v609
  %650 = vmatprep.subr.mxu0 0.0
  %651 = vmatpush1.msra.mxu0 %v608
  %652 = vmatprep.subr.mxu0 0.0
  %653 = vmatpush1.msra.mxu0 %v607
  %654 = vmatprep.subr.mxu0 0.0
  %655 = vmatpush2.msra.mxu0 0.0
  %656 = vmatprep.subr.mxu0 0.0
  %657 = vmatpush2.msra.mxu0 0.0
  %658 = vmatprep.subr.mxu0 0.0
  %659 = vmatpush2.msra.mxu0 0.0
  %660 = vmatprep.subr.mxu0 0.0
  %661 = vmatpush2.msra.mxu0 0.0
  %662 = vmatprep.subr.mxu0 0.0
  %663 = vmatpush2.msra.mxu0 0.0
  %664 = vmatprep.subr.mxu0 0.0
  %665 = vmatpush2.msra.mxu0 0.0
  %666 = vmatprep.subr.mxu0 0.0
  %667 = vmatpush2.msra.mxu0 0.0
  %668 = vmatprep.subr.mxu0 0.0
  %669 = vmatpush2.msra.mxu0 0.0
  %670 = vmatprep.subr.mxu0 0.0
  %671 = vmatpush2.msra.mxu0 0.0
  %672 = vmatprep.subr.mxu0 0.0
  %673 = vmatpush2.msra.mxu0 0.0
  %674 = vmatprep.subr.mxu0 0.0
  %675 = vmatpush2.msra.mxu0 0.0
  %676 = vmatprep.subr.mxu0 0.0
  %677 = vmatpush2.msra.mxu0 0.0
  %678 = vmatprep.subr.mxu0 0.0
  %679 = vmatpush2.msra.mxu0 0.0
  %680 = vmatprep.subr.mxu0 0.0
  %681 = vmatpush2.msra.mxu0 0.0
  %682 = vmatprep.subr.mxu0 0.0
  %683 = vmatpush2.msra.mxu0 0.0
  %684 = vmatprep.subr.mxu0 0.0
  %685 = vmatpush2.msra.mxu0 0.0
  %686 = vmatprep.mubr.f32.mxu0 0.0
  %687 = vmatmul.mubr.f32.gmra.mxu0 %v620
  %v688 = vpop.f32.mrf.mxu0
  %v689 = vadd.f32 %v616, %v688
  %v690 = vpop.f32.mrf.mxu0
  %691 = vdwg.mxu0
  %692 = vst [vmem:[%s5] sm:$0xff] %v689
  // Predicated region
  $region22: #{hybrid_quantum_classifier.1} parent=0 // pred_check
    _
  $region23: #{hybrid_quantum_classifier.1} parent=0 // pred_check_branch
    %694 = sbr.rel (0) target = $region25
  $region24: #{hybrid_quantum_classifier.1} parent=0 // pred_region
    _
  $region25: #{hybrid_quantum_classifier.1} parent=0 // pred_fallthru
    _
  // Predicated region
  $region26: #{hybrid_quantum_classifier.1} parent=0 // pred_check
    _
  $region27: #{hybrid_quantum_classifier.1} parent=0 // pred_check_branch
    %696 = sbr.rel (0) target = $region29
  $region28: #{hybrid_quantum_classifier.1} parent=0 // pred_region
    _
  $region29: #{hybrid_quantum_classifier.1} parent=0 // pred_fallthru
    _

</llo_original>
